<compile_context>
chip_gen: v5e
topology: v5e:2x2
jax: 0.10.0
libtpu: 0.0.40
codegen_flags: <defaults>
</compile_context>

<pallas_src>
import functools

import jax
import jax.numpy as jnp
from jax import lax
from jax.experimental import pallas as pl
from jax.experimental.pallas import tpu as pltpu

EPS = 1e-5


# --------------------------------- kernel -----------------------------------

def _det_bottleneck_kernel(x_ref, w1e_ref, b1e_ref, w2_ref, b2_ref,
                           w3_ref, b3_ref, out_ref, *, H):
    NH, WC = out_ref.shape                      # (N*H, W*C) = (32, 128)
    x = x_ref[...]                              # (N*H, W*Cin_pad) = (32, 128)

    # Stage 1: bottleneck[0] (1x1 conv + BN + ReLU) and the extra branch
    # (1x1 conv + BN) fused into one K=128 matmul over the shared input.
    # BN scales pre-folded into weight columns; both biases added here once.
    y1e = jnp.dot(x, w1e_ref[...], preferred_element_type=jnp.float32)
    y1e = y1e + b1e_ref[...]
    y1 = jnp.maximum(y1e[:, :WC], 0.0)          # main branch, post-ReLU
    ye = y1e[:, WC:]                            # extra branch (no ReLU)

    # Stage 2: 3x3 conv, stride 1, padding 2, dilation 2 (+ BN + ReLU).
    # One K=128 matmul yields the three ky taps as adjacent 128-lane groups;
    # the h+-2 row shifts are XLU rolls + per-image boundary masks (VPU),
    # entirely off the MXU critical path.
    z = jnp.dot(y1, w2_ref[...], preferred_element_type=jnp.float32)  # (NH, 3*WC)
    z0 = z[:, :WC]                              # ky=0 tap: needs input row h-2
    z1 = z[:, WC:2 * WC]                        # ky=1 tap: row h
    z2 = z[:, 2 * WC:]                          # ky=2 tap: needs input row h+2
    h_idx = lax.broadcasted_iota(jnp.int32, (NH, WC), 0) % H
    t0 = jnp.where(h_idx >= 2, pltpu.roll(z0, shift=2, axis=0), 0.0)
    t2 = jnp.where(h_idx < H - 2, pltpu.roll(z2, shift=NH - 2, axis=0), 0.0)
    y2 = jnp.maximum(t0 + z1 + t2 + b2_ref[...], 0.0)

    # Stage 3: 1x1 conv + BN (scale folded, no ReLU), residual add of the
    # extra branch, combined bias added once, final ReLU, lane-dense store.
    y3 = jnp.dot(y2, w3_ref[...], preferred_element_type=jnp.float32)
    out_ref[...] = jnp.maximum(y3 + ye + b3_ref[...], 0.0).astype(out_ref.dtype)


# --------------------------------- wrapper ----------------------------------

def det_bottleneck(x, p):
    """x: (N, H, W, Cin) float32; returns (N, H, W, C) float32."""
    N, H, W, Cin = x.shape
    WC = p["w3"].shape[1]                       # W * C
    C = WC // W
    Cin_pad = p["w1e"].shape[0] // W            # padded input channels (8)
    if Cin_pad > Cin:
        x = jnp.pad(x, ((0, 0), (0, 0), (0, 0), (0, Cin_pad - Cin)))
    x2 = x.reshape(N * H, W * Cin_pad)          # batch folded into matmul M

    out = pl.pallas_call(
        functools.partial(_det_bottleneck_kernel, H=H),
        out_shape=jax.ShapeDtypeStruct((N * H, WC), jnp.float32),
    )(x2, p["w1e"], p["b1e"], p["w2"], p["b2"], p["w3"], p["b3"])
    return out.reshape(N, H, W, C)


# ----------------------------- parameter setup ------------------------------

def make_raw_params(key, Cin, C):
    ks = jax.random.split(key, 24)
    it = iter(ks)

    def bn_params(c):
        g = jax.random.uniform(next(it), (c,), minval=0.5, maxval=1.5)
        b = 0.1 * jax.random.normal(next(it), (c,))
        m = 0.1 * jax.random.normal(next(it), (c,))
        v = jax.random.uniform(next(it), (c,), minval=0.5, maxval=1.5)
        return g, b, m, v

    return {
        "w1": 0.3 * jax.random.normal(next(it), (Cin, C)),
        "bn1": bn_params(C),
        "w2": 0.1 * jax.random.normal(next(it), (3, 3, C, C)),   # HWIO
        "bn2": bn_params(C),
        "w3": 0.3 * jax.random.normal(next(it), (C, C)),
        "b3": 0.1 * jax.random.normal(next(it), (C,)),
        "bn3": bn_params(C),
        "we": 0.3 * jax.random.normal(next(it), (Cin, C)),
        "be_conv": 0.1 * jax.random.normal(next(it), (C,)),
        "bne": bn_params(C),
    }


def pack_params(raw, H, W, lane_target=128):
    """Fold BN into weights and expand to the lane-dense (w-major) layout."""
    Cin, C = raw["w1"].shape
    WC = W * C
    f32 = jnp.float32

    # Pad Cin with zero input channels so the x tile is a full 128-lane
    # multiple (exact: zero rows contribute nothing).
    Cin_pad = Cin
    if (W * Cin) % lane_target != 0 and lane_target % W == 0:
        Cin_pad = max(Cin, lane_target // W)

    def fold(bn, conv_bias=None):
        g, b, m, v = bn
        scale = g / jnp.sqrt(v + EPS)
        bias = b - m * scale
        if conv_bias is not None:
            bias = bias + conv_bias * scale
        return scale.astype(f32), bias.astype(f32)

    s1, b1 = fold(raw["bn1"])
    s2, b2 = fold(raw["bn2"])
    s3, b3 = fold(raw["bn3"], raw["b3"])
    se, be = fold(raw["bne"], raw["be_conv"])

    eye_w = jnp.eye(W, dtype=f32)

    def pad_in(w):                              # (Cin, C) -> (Cin_pad, C)
        return jnp.pad(w.astype(f32), ((0, Cin_pad - Cin), (0, 0)))

    # Fused first stage: [main 1x1 | extra 1x1], BN scale folded into columns,
    # block-diagonal (kron) expansion for the (NH, W*Cin_pad)->(NH, 2*WC) matmul.
    w1s = pad_in(raw["w1"]) * s1[None, :]
    wes = pad_in(raw["we"]) * se[None, :]
    w1e = jnp.concatenate([jnp.kron(eye_w, w1s), jnp.kron(eye_w, wes)], axis=1)
    b1e = jnp.concatenate([jnp.tile(b1, W), jnp.tile(be, W)])[None, :]

    # Dilated 3x3 conv: BN scale folded into each tap; dx (column) shifts folded
    # into shifted-block-diagonal blocks; the three ky blocks laid side by side
    # along the OUTPUT axis -> one (WC, 3*WC) weight, one K=WC matmul; the
    # h+-2 row shifts are applied in-kernel via pltpu.roll + mask.
    # NOTE(scaling): the kron expansion is O((W*C)^2) per block (3x for w2); at
    # real DetNet sizes (C=256, W>=32) it blows past v7x's 64 MiB VMEM -- keep
    # W in the sublane dim / tile K over an 'arbitrary' grid axis instead.
    w2s = raw["w2"].astype(f32) * s2[None, None, None, :]        # HWIO * scale
    ky_blocks = []
    for ky in range(3):
        m_ky = jnp.zeros((WC, WC), f32)
        for kx in range(3):
            dx = 2 * (kx - 1)
            p_dx = jnp.eye(W, k=-dx, dtype=f32)   # input col w+dx -> output col w
            m_ky = m_ky + jnp.kron(p_dx, w2s[ky, kx])
        ky_blocks.append(m_ky)
    w2 = jnp.concatenate(ky_blocks, axis=1)                      # (WC, 3*WC)
    b2t = jnp.tile(b2, W)[None, :]

    # Final 1x1 conv: conv bias + BN folded; combined bias added once at end.
    w3s = jnp.kron(eye_w, raw["w3"].astype(f32) * s3[None, :])   # (WC, WC)
    b3t = jnp.tile(b3, W)[None, :]

    return {"w1e": w1e, "b1e": b1e, "w2": w2, "b2": b2t, "w3": w3s, "b3": b3t}


# ------------------------- pure-JAX reference (check) -----------------------

def reference(x, raw):
    def conv1x1(h, w, b=None):
        y = jnp.einsum("nhwc,cd->nhwd", h, w)
        return y if b is None else y + b

    def bn(h, p):
        g, b, m, v = p
        return (h - m) / jnp.sqrt(v + EPS) * g + b

    y = jax.nn.relu(bn(conv1x1(x, raw["w1"]), raw["bn1"]))
    y = lax.conv_general_dilated(
        y, raw["w2"], window_strides=(1, 1), padding=((2, 2), (2, 2)),
        rhs_dilation=(2, 2), dimension_numbers=("NHWC", "HWIO", "NHWC"))
    y = jax.nn.relu(bn(y, raw["bn2"]))
    y = bn(conv1x1(y, raw["w3"], raw["b3"]), raw["bn3"])
    e = bn(conv1x1(x, raw["we"], raw["be_conv"]), raw["bne"])
    return jax.nn.relu(y + e)


if __name__ == "__main__":
    N, H, W, Cin, C = 2, 16, 16, 4, 8   # NHWC; equals NCHW [2, 4, 16, 16]

    key = jax.random.PRNGKey(0)
    kx_, kp = jax.random.split(key)
    x = jax.random.normal(kx_, (N, H, W, Cin), dtype=jnp.float32)
    raw = make_raw_params(kp, Cin, C)
    packed = pack_params(raw, H, W)

    out = jax.block_until_ready(det_bottleneck(x, packed))

    ref = reference(x, raw)
    assert out.shape == (N, H, W, C)
    err = jnp.max(jnp.abs(out - ref))
    assert jnp.allclose(out, ref, atol=1e-4, rtol=1e-4), f"max abs err = {err}"
    print("KERNEL_OK")
</pallas_src>

<mosaic_0001>
module attributes {stable_mosaic.version = 11 : i64} {
  func.func @_det_bottleneck_kernel(%arg0: memref<32x128xf32, #tpu.memory_space<vmem>>, %arg1: memref<128x256xf32, #tpu.memory_space<vmem>>, %arg2: memref<1x256xf32, #tpu.memory_space<vmem>>, %arg3: memref<128x384xf32, #tpu.memory_space<vmem>>, %arg4: memref<1x128xf32, #tpu.memory_space<vmem>>, %arg5: memref<128x128xf32, #tpu.memory_space<vmem>>, %arg6: memref<1x128xf32, #tpu.memory_space<vmem>>, %arg7: memref<32x128xf32, #tpu.memory_space<vmem>>) attributes {dimension_semantics = [], scalar_prefetch = 0 : i64, scratch_operands = 0 : i64, tpu.core_type = #tpu.core_type<tc>} {
    %c0 = arith.constant 0 : index
    %c0_0 = arith.constant 0 : index
    %0 = vector.load %arg0[%c0, %c0_0] : memref<32x128xf32, #tpu.memory_space<vmem>>, vector<32x128xf32>
    %c0_1 = arith.constant 0 : index
    %c0_2 = arith.constant 0 : index
    %1 = vector.load %arg1[%c0_1, %c0_2] : memref<128x256xf32, #tpu.memory_space<vmem>>, vector<128x256xf32>
    %cst = arith.constant dense<0.000000e+00> : vector<32x256xf32>
    %2 = tpu.matmul %0, %1, %cst {dimension_numbers = #tpu.dot_dimension_numbers<[1], [0], [0], [1], [0, 0, 1, 1], [], []>} : vector<32x128xf32>, vector<128x256xf32>, vector<32x256xf32> -> vector<32x256xf32>
    %c0_3 = arith.constant 0 : index
    %c0_4 = arith.constant 0 : index
    %3 = vector.load %arg2[%c0_3, %c0_4] : memref<1x256xf32, #tpu.memory_space<vmem>>, vector<1x256xf32>
    %4 = vector.broadcast %3 : vector<1x256xf32> to vector<32x256xf32>
    %5 = arith.addf %2, %4 : vector<32x256xf32>
    %6 = vector.extract_strided_slice %5 {offsets = [0, 0], sizes = [32, 128], strides = [1, 1]} : vector<32x256xf32> to vector<32x128xf32>
    %cst_5 = arith.constant 0.000000e+00 : f32
    %7 = vector.broadcast %cst_5 : f32 to vector<32x128xf32>
    %8 = arith.maximumf %6, %7 : vector<32x128xf32>
    %9 = vector.extract_strided_slice %5 {offsets = [0, 128], sizes = [32, 128], strides = [1, 1]} : vector<32x256xf32> to vector<32x128xf32>
    %c0_6 = arith.constant 0 : index
    %c0_7 = arith.constant 0 : index
    %10 = vector.load %arg3[%c0_6, %c0_7] : memref<128x384xf32, #tpu.memory_space<vmem>>, vector<128x384xf32>
    %cst_8 = arith.constant dense<0.000000e+00> : vector<32x384xf32>
    %11 = tpu.matmul %8, %10, %cst_8 {dimension_numbers = #tpu.dot_dimension_numbers<[1], [0], [0], [1], [0, 0, 1, 1], [], []>} : vector<32x128xf32>, vector<128x384xf32>, vector<32x384xf32> -> vector<32x384xf32>
    %12 = vector.extract_strided_slice %11 {offsets = [0, 0], sizes = [32, 128], strides = [1, 1]} : vector<32x384xf32> to vector<32x128xf32>
    %13 = vector.extract_strided_slice %11 {offsets = [0, 128], sizes = [32, 128], strides = [1, 1]} : vector<32x384xf32> to vector<32x128xf32>
    %14 = vector.extract_strided_slice %11 {offsets = [0, 256], sizes = [32, 128], strides = [1, 1]} : vector<32x384xf32> to vector<32x128xf32>
    %15 = tpu.iota {dimensions = array<i32: 0>} : vector<32x128xi32>
    %c16_i32 = arith.constant 16 : i32
    %c0_i32 = arith.constant 0 : i32
    %16 = arith.cmpi eq, %c16_i32, %c0_i32 : i32
    %c1_i32 = arith.constant 1 : i32
    %17 = arith.select %16, %c1_i32, %c16_i32 : i32
    %18 = vector.broadcast %17 : i32 to vector<32x128xi32>
    %19 = arith.remsi %15, %18 : vector<32x128xi32>
    %c0_i32_9 = arith.constant 0 : i32
    %20 = vector.broadcast %c0_i32_9 : i32 to vector<32x128xi32>
    %21 = arith.cmpi ne, %19, %20 : vector<32x128xi32>
    %c0_i32_10 = arith.constant 0 : i32
    %22 = vector.broadcast %c0_i32_10 : i32 to vector<32x128xi32>
    %23 = arith.cmpi slt, %19, %22 : vector<32x128xi32>
    %c0_i32_11 = arith.constant 0 : i32
    %24 = arith.cmpi slt, %17, %c0_i32_11 : i32
    %25 = vector.broadcast %24 : i1 to vector<32x128xi1>
    %26 = vector.broadcast %25 : vector<32x128xi1> to vector<32x128xi1>
    %27 = arith.xori %23, %26 : vector<32x128xi1>
    %28 = arith.andi %27, %21 : vector<32x128xi1>
    %29 = vector.broadcast %17 : i32 to vector<32x128xi32>
    %30 = arith.addi %19, %29 : vector<32x128xi32>
    %31 = arith.select %28, %30, %19 : vector<32x128xi1>, vector<32x128xi32>
    %c2_i32 = arith.constant 2 : i32
    %32 = vector.broadcast %c2_i32 : i32 to vector<32x128xi32>
    %33 = arith.cmpi sge, %31, %32 : vector<32x128xi32>
    %c2_i32_12 = arith.constant 2 : i32
    %34 = tpu.dynamic_rotate %12 by %c2_i32_12 dim 0 : vector<32x128xf32>, i32 -> vector<32x128xf32>
    %cst_13 = arith.constant 0.000000e+00 : f32
    %35 = vector.broadcast %cst_13 : f32 to vector<32x128xf32>
    %36 = arith.select %33, %34, %35 : vector<32x128xi1>, vector<32x128xf32>
    %c14_i32 = arith.constant 14 : i32
    %37 = vector.broadcast %c14_i32 : i32 to vector<32x128xi32>
    %38 = arith.cmpi slt, %31, %37 : vector<32x128xi32>
    %c30_i32 = arith.constant 30 : i32
    %39 = tpu.dynamic_rotate %14 by %c30_i32 dim 0 : vector<32x128xf32>, i32 -> vector<32x128xf32>
    %cst_14 = arith.constant 0.000000e+00 : f32
    %40 = vector.broadcast %cst_14 : f32 to vector<32x128xf32>
    %41 = arith.select %38, %39, %40 : vector<32x128xi1>, vector<32x128xf32>
    %42 = arith.addf %36, %13 : vector<32x128xf32>
    %43 = arith.addf %42, %41 : vector<32x128xf32>
    %c0_15 = arith.constant 0 : index
    %c0_16 = arith.constant 0 : index
    %44 = vector.load %arg4[%c0_15, %c0_16] : memref<1x128xf32, #tpu.memory_space<vmem>>, vector<1x128xf32>
    %45 = vector.broadcast %44 : vector<1x128xf32> to vector<32x128xf32>
    %46 = arith.addf %43, %45 : vector<32x128xf32>
    %cst_17 = arith.constant 0.000000e+00 : f32
    %47 = vector.broadcast %cst_17 : f32 to vector<32x128xf32>
    %48 = arith.maximumf %46, %47 : vector<32x128xf32>
    %c0_18 = arith.constant 0 : index
    %c0_19 = arith.constant 0 : index
    %49 = vector.load %arg5[%c0_18, %c0_19] : memref<128x128xf32, #tpu.memory_space<vmem>>, vector<128x128xf32>
    %cst_20 = arith.constant dense<0.000000e+00> : vector<32x128xf32>
    %50 = tpu.matmul %48, %49, %cst_20 {dimension_numbers = #tpu.dot_dimension_numbers<[1], [0], [0], [1], [0, 0, 1, 1], [], []>} : vector<32x128xf32>, vector<128x128xf32>, vector<32x128xf32> -> vector<32x128xf32>
    %51 = arith.addf %50, %9 : vector<32x128xf32>
    %c0_21 = arith.constant 0 : index
    %c0_22 = arith.constant 0 : index
    %52 = vector.load %arg6[%c0_21, %c0_22] : memref<1x128xf32, #tpu.memory_space<vmem>>, vector<1x128xf32>
    %53 = vector.broadcast %52 : vector<1x128xf32> to vector<32x128xf32>
    %54 = arith.addf %51, %53 : vector<32x128xf32>
    %cst_23 = arith.constant 0.000000e+00 : f32
    %55 = vector.broadcast %cst_23 : f32 to vector<32x128xf32>
    %56 = arith.maximumf %54, %55 : vector<32x128xf32>
    %c0_24 = arith.constant 0 : index
    %c0_25 = arith.constant 0 : index
    %57 = vector.load %arg7[%c0_24, %c0_25] : memref<32x128xf32, #tpu.memory_space<vmem>>, vector<32x128xf32>
    tpu.vector_store %arg7[%c0_24, %c0_25], %56 {strides = array<i32>} : memref<32x128xf32, #tpu.memory_space<vmem>>, vector<32x128xf32>,
    return
  }
}

</mosaic_0001>

<llo_original>
// kernel: tpu_custom_call.1
$region0: #{tpu_custom_call.1}
  #allocation0 [shape = 'u32[]', space=smem, size = 0x4, offset = 0x4, fixed_abs, tag = 'smem constant byte address 0x4 - core index']
  #allocation1 [shape = 'u32[72,128]{1,0:T(1,128)}', space=vmem, size = 0x9000, scoped, tag = 'internal scratch']
  %s0 = inlined_call_operand.hbm [shape: f32[32,128], index: 0, kind: input, shape index: {}]
  %s1 = inlined_call_operand.hbm [shape: f32[128,256], index: 1, kind: input, shape index: {}]
  %s2 = inlined_call_operand.hbm [shape: f32[1,256], index: 2, kind: input, shape index: {}]
  %s3 = inlined_call_operand.hbm [shape: f32[128,384], index: 3, kind: input, shape index: {}]
  %s4 = inlined_call_operand.vmem [shape: f32[1,128], index: 4, kind: input, shape index: {}]
  %s5 = inlined_call_operand.hbm [shape: f32[128,128], index: 5, kind: input, shape index: {}]
  %s6 = inlined_call_operand.vmem [shape: f32[1,128], index: 6, kind: input, shape index: {}]
  %s7 = inlined_call_operand.hbm [shape: f32[32,128], index: 7, kind: output, shape index: {}]
  %s8 = sld [smem:[#allocation0]]
  $region58: #{tpu_custom_call.1} parent=0
    _
  %s10 = ssub.s32 1, %s8
  %s11 = scalar_select 0, %s10, %s8
  $region1: #{tpu_custom_call.1} parent=0
    #allocation2 [shape = 'u8[16384]{0}', space=vmem, size = 0x4000, scoped, tag = 'input window, operand 0, single buffered']
    #allocation3 [shape = 's32[1]{0}', space=sflag, size = 0x4, scoped, tag = 'scoped memory for tpu_custom_call.1']
    #allocation4 [shape = 's32[1]{0}', space=sflag, size = 0x4, scoped, tag = 'scoped memory for tpu_custom_call.1']
    #allocation5 [shape = 'u8[131072]{0}', space=vmem, size = 0x20000, scoped, tag = 'input window, operand 1, single buffered']
    #allocation6 [shape = 's32[1]{0}', space=sflag, size = 0x4, scoped, tag = 'scoped memory for tpu_custom_call.1']
    #allocation7 [shape = 'u8[1024]{0}', space=vmem, size = 0x400, scoped, tag = 'input window, operand 2, single buffered']
    #allocation8 [shape = 'u8[196608]{0}', space=vmem, size = 0x30000, scoped, tag = 'input window, operand 3, single buffered']
    #allocation9 [shape = 's32[1]{0}', space=sflag, size = 0x4, scoped, tag = 'scoped memory for tpu_custom_call.1']
    #allocation10 [shape = 'u8[65536]{0}', space=vmem, size = 0x10000, scoped, tag = 'input window, operand 5, single buffered']
    #allocation11 [shape = 'u8[16384]{0}', space=vmem, size = 0x4000, scoped, tag = 'output window, operand 0, single buffered']
    %12 = vsyncpa [#allocation3], 0
    %13 = vsyncpa [#allocation6], 0
    %14 = vsyncpa [#allocation9], 0
    %15 = vsyncpa [#allocation4], 0
    // Predicated region
    $region2: #{tpu_custom_call.1} parent=1 // pred_check
      _
    $region3: #{tpu_custom_call.1} parent=1 // pred_check_branch
      %17 = sbr.rel (0) target = $region5
    $region4: #{tpu_custom_call.1} parent=1 // pred_region
      %19 = vsyncadd [#allocation3], 0
      %s20 = sshll.u32 %s0, 4
      %s21 = int_to_ptr.hbm [resolvable:$true] %s20
      %s22 = sshll.u32 [#allocation2], 4
      %s23 = int_to_ptr.vmem [resolvable:$true] %s22
      %28 = dma.hbm_to_vmem [thread:$0]  %s21, 512, %s23, [#allocation3], 128, 128, 8
    $region5: #{tpu_custom_call.1} parent=1 // pred_fallthru
      _
    // Predicated region
    $region6: #{tpu_custom_call.1} parent=1 // pred_check
      _
    $region7: #{tpu_custom_call.1} parent=1 // pred_check_branch
      %30 = sbr.rel (0) target = $region9
    $region8: #{tpu_custom_call.1} parent=1 // pred_region
      %32 = vsyncadd [#allocation6], 0
      %s33 = sshll.u32 %s1, 4
      %s34 = int_to_ptr.hbm [resolvable:$true] %s33
      %s35 = sshll.u32 [#allocation5], 4
      %s36 = int_to_ptr.vmem [resolvable:$true] %s35
      %41 = dma.hbm_to_vmem [thread:$0]  %s34, 4096, %s36, [#allocation6], 256, 256, 16
    $region9: #{tpu_custom_call.1} parent=1 // pred_fallthru
      _
    // Predicated region
    $region10: #{tpu_custom_call.1} parent=1 // pred_check
      _
    $region11: #{tpu_custom_call.1} parent=1 // pred_check_branch
      %43 = sbr.rel (0) target = $region13
    $region12: #{tpu_custom_call.1} parent=1 // pred_region
      %45 = vsyncadd [#allocation6], 0
      %s47 = sshll.u32 %s2, 4
      %s48 = int_to_ptr.hbm [resolvable:$true] %s47
      %s49 = sshll.u32 [#allocation7], 4
      %s50 = int_to_ptr.vmem [resolvable:$true] %s49
      %52 = dma.hbm_to_vmem [thread:$0]  %s48, 32, %s50, [#allocation6]
    $region13: #{tpu_custom_call.1} parent=1 // pred_fallthru
      _
    // Predicated region
    $region14: #{tpu_custom_call.1} parent=1 // pred_check
      _
    $region15: #{tpu_custom_call.1} parent=1 // pred_check_branch
      %54 = sbr.rel (0) target = $region17
    $region16: #{tpu_custom_call.1} parent=1 // pred_region
      %56 = vsyncadd [#allocation9], 0
      %s57 = sshll.u32 %s3, 4
      %s58 = int_to_ptr.hbm [resolvable:$true] %s57
      %s59 = sshll.u32 [#allocation8], 4
      %s60 = int_to_ptr.vmem [resolvable:$true] %s59
      %65 = dma.hbm_to_vmem [thread:$0]  %s58, 6144, %s60, [#allocation9], 384, 384, 24
    $region17: #{tpu_custom_call.1} parent=1 // pred_fallthru
      _
    // Predicated region
    $region18: #{tpu_custom_call.1} parent=1 // pred_check
      _
    $region19: #{tpu_custom_call.1} parent=1 // pred_check_branch
      %67 = sbr.rel (0) target = $region21
    $region20: #{tpu_custom_call.1} parent=1 // pred_region
      _
    $region21: #{tpu_custom_call.1} parent=1 // pred_fallthru
      _
    // Predicated region
    $region22: #{tpu_custom_call.1} parent=1 // pred_check
      _
    $region23: #{tpu_custom_call.1} parent=1 // pred_check_branch
      %69 = sbr.rel (0) target = $region25
    $region24: #{tpu_custom_call.1} parent=1 // pred_region
      %71 = vsyncadd [#allocation9], 0
      %s72 = sshll.u32 %s5, 4
      %s73 = int_to_ptr.hbm [resolvable:$true] %s72
      %s74 = sshll.u32 [#allocation10], 4
      %s75 = int_to_ptr.vmem [resolvable:$true] %s74
      %80 = dma.hbm_to_vmem [thread:$0]  %s73, 2048, %s75, [#allocation9], 128, 128, 8
    $region25: #{tpu_custom_call.1} parent=1 // pred_fallthru
      _
    // Predicated region
    $region26: #{tpu_custom_call.1} parent=1 // pred_check
      _
    $region27: #{tpu_custom_call.1} parent=1 // pred_check_branch
      %82 = sbr.rel (0) target = $region29
    $region28: #{tpu_custom_call.1} parent=1 // pred_region
      _
    $region29: #{tpu_custom_call.1} parent=1 // pred_fallthru
      _
    // Predicated region
    $region30: #{tpu_custom_call.1} parent=1 // pred_check
      _
    $region31: #{tpu_custom_call.1} parent=1 // pred_check_branch
      %84 = sbr.rel (0) target = $region33
    $region32: #{tpu_custom_call.1} parent=1 // pred_region
      %86 = dma.done [#allocation3], 512
    $region33: #{tpu_custom_call.1} parent=1 // pred_fallthru
      _
    // Predicated region
    $region34: #{tpu_custom_call.1} parent=1 // pred_check
      _
    $region35: #{tpu_custom_call.1} parent=1 // pred_check_branch
      %88 = sbr.rel (0) target = $region37
    $region36: #{tpu_custom_call.1} parent=1 // pred_region
      %90 = dma.done [#allocation6], 4096
    $region37: #{tpu_custom_call.1} parent=1 // pred_fallthru
      _
    // Predicated region
    $region38: #{tpu_custom_call.1} parent=1 // pred_check
      _
    $region39: #{tpu_custom_call.1} parent=1 // pred_check_branch
      %92 = sbr.rel (0) target = $region41
    $region40: #{tpu_custom_call.1} parent=1 // pred_region
      %94 = dma.done [#allocation6], 32
    $region41: #{tpu_custom_call.1} parent=1 // pred_fallthru
      _
    // Predicated region
    $region42: #{tpu_custom_call.1} parent=1 // pred_check
      _
    $region43: #{tpu_custom_call.1} parent=1 // pred_check_branch
      %96 = sbr.rel (0) target = $region45
    $region44: #{tpu_custom_call.1} parent=1 // pred_region
      %98 = dma.done [#allocation9], 6144
    $region45: #{tpu_custom_call.1} parent=1 // pred_fallthru
      _
    // Predicated region
    $region46: #{tpu_custom_call.1} parent=1 // pred_check
      _
    $region47: #{tpu_custom_call.1} parent=1 // pred_check_branch
      %100 = sbr.rel (0) target = $region49
    $region48: #{tpu_custom_call.1} parent=1 // pred_region
      %102 = dma.done [#allocation9], 2048
    $region49: #{tpu_custom_call.1} parent=1 // pred_fallthru
      _
    %v103 = vld [vmem:[#allocation2] sm:$0xff]
    %v104 = vld [vmem:[#allocation2 + $0x8] sm:$0xff]
    %v105 = vld [vmem:[#allocation2 + $0x10] sm:$0xff]
    %v106 = vld [vmem:[#allocation2 + $0x18] sm:$0xff]
    %v107 = vld [vmem:[#allocation5] sm:$0xff]
    %v108 = vld [vmem:[#allocation5 + $0x8] sm:$0xff]
    %v109 = vld [vmem:[#allocation5 + $0x10] sm:$0xff]
    %v110 = vld [vmem:[#allocation5 + $0x18] sm:$0xff]
    %v111 = vld [vmem:[#allocation5 + $0x20] sm:$0xff]
    %v112 = vld [vmem:[#allocation5 + $0x28] sm:$0xff]
    %v113 = vld [vmem:[#allocation5 + $0x30] sm:$0xff]
    %v114 = vld [vmem:[#allocation5 + $0x38] sm:$0xff]
    %v115 = vld [vmem:[#allocation5 + $0x40] sm:$0xff]
    %v116 = vld [vmem:[#allocation5 + $0x48] sm:$0xff]
    %v117 = vld [vmem:[#allocation5 + $0x50] sm:$0xff]
    %v118 = vld [vmem:[#allocation5 + $0x58] sm:$0xff]
    %v119 = vld [vmem:[#allocation5 + $0x60] sm:$0xff]
    %v120 = vld [vmem:[#allocation5 + $0x68] sm:$0xff]
    %v121 = vld [vmem:[#allocation5 + $0x70] sm:$0xff]
    %v122 = vld [vmem:[#allocation5 + $0x78] sm:$0xff]
    %v123 = vld [vmem:[#allocation5 + $0x80] sm:$0xff]
    %v124 = vld [vmem:[#allocation5 + $0x88] sm:$0xff]
    %v125 = vld [vmem:[#allocation5 + $0x90] sm:$0xff]
    %v126 = vld [vmem:[#allocation5 + $0x98] sm:$0xff]
    %v127 = vld [vmem:[#allocation5 + $0xa0] sm:$0xff]
    %v128 = vld [vmem:[#allocation5 + $0xa8] sm:$0xff]
    %v129 = vld [vmem:[#allocation5 + $0xb0] sm:$0xff]
    %v130 = vld [vmem:[#allocation5 + $0xb8] sm:$0xff]
    %v131 = vld [vmem:[#allocation5 + $0xc0] sm:$0xff]
    %v132 = vld [vmem:[#allocation5 + $0xc8] sm:$0xff]
    %v133 = vld [vmem:[#allocation5 + $0xd0] sm:$0xff]
    %v134 = vld [vmem:[#allocation5 + $0xd8] sm:$0xff]
    %v135 = vld [vmem:[#allocation5 + $0xe0] sm:$0xff]
    %v136 = vld [vmem:[#allocation5 + $0xe8] sm:$0xff]
    %v137 = vld [vmem:[#allocation5 + $0xf0] sm:$0xff]
    %v138 = vld [vmem:[#allocation5 + $0xf8] sm:$0xff]
    %v139 = vld [vmem:[#allocation7] sm:$0x3]
    %v141 = vperm.slane %v139, 0
    %v142 = vperm.slane %v139, 1
    %145 = vmatpush.msra.mxu0 %v137
    %146 = vmatpush.msra.mxu0 %v135
    %147 = vmatpush.msra.mxu0 %v133
    %148 = vmatpush.msra.mxu0 %v131
    %149 = vmatpush.msra.mxu0 %v129
    %150 = vmatpush.msra.mxu0 %v127
    %151 = vmatpush.msra.mxu0 %v125
    %152 = vmatpush.msra.mxu0 %v123
    %153 = vmatpush.msra.mxu0 %v121
    %154 = vmatpush.msra.mxu0 %v119
    %155 = vmatpush.msra.mxu0 %v117
    %156 = vmatpush.msra.mxu0 %v115
    %157 = vmatpush.msra.mxu0 %v113
    %158 = vmatpush.msra.mxu0 %v111
    %159 = vmatpush.msra.mxu0 %v109
    %160 = vmatpush.msra.mxu0 %v107
    %161 = vmatmul.f32.gmra.mxu0 %v103
    %v162 = vpop.f32.mrf.mxu0
    %v163 = vadd.f32 %v141, %v162
    %164 = vmatmul.f32.gmra.mxu0 %v104
    %v165 = vpop.f32.mrf.mxu0
    %v166 = vadd.f32 %v141, %v165
    %167 = vmatmul.f32.gmra.mxu0 %v105
    %v168 = vpop.f32.mrf.mxu0
    %v169 = vadd.f32 %v141, %v168
    %170 = vmatmul.f32.gmra.mxu0 %v106
    %v171 = vpop.f32.mrf.mxu0
    %v172 = vadd.f32 %v141, %v171
    %173 = vdwg.mxu0
    %174 = vmatpush.msra.mxu0 %v138
    %175 = vmatpush.msra.mxu0 %v136
    %176 = vmatpush.msra.mxu0 %v134
    %177 = vmatpush.msra.mxu0 %v132
    %178 = vmatpush.msra.mxu0 %v130
    %179 = vmatpush.msra.mxu0 %v128
    %180 = vmatpush.msra.mxu0 %v126
    %181 = vmatpush.msra.mxu0 %v124
    %182 = vmatpush.msra.mxu0 %v122
    %183 = vmatpush.msra.mxu0 %v120
    %184 = vmatpush.msra.mxu0 %v118
    %185 = vmatpush.msra.mxu0 %v116
    %186 = vmatpush.msra.mxu0 %v114
    %187 = vmatpush.msra.mxu0 %v112
    %188 = vmatpush.msra.mxu0 %v110
    %189 = vmatpush.msra.mxu0 %v108
    %190 = vmatmul.f32.gmra.mxu0 %v103
    %v191 = vpop.f32.mrf.mxu0
    %v192 = vadd.f32 %v142, %v191
    %193 = vmatmul.f32.gmra.mxu0 %v104
    %v194 = vpop.f32.mrf.mxu0
    %v195 = vadd.f32 %v142, %v194
    %196 = vmatmul.f32.gmra.mxu0 %v105
    %v197 = vpop.f32.mrf.mxu0
    %v198 = vadd.f32 %v142, %v197
    %199 = vmatmul.f32.gmra.mxu0 %v106
    %v200 = vpop.f32.mrf.mxu0
    %v201 = vadd.f32 %v142, %v200
    %202 = vdwg.mxu0
    %v203 = vmax.f32 %v163, 0.0
    %v204 = vmax.f32 %v166, 0.0
    %v205 = vmax.f32 %v169, 0.0
    %v206 = vmax.f32 %v172, 0.0
    %v207 = vld [vmem:[#allocation8] sm:$0xff]
    %v208 = vld [vmem:[#allocation8 + $0x8] sm:$0xff]
    %v209 = vld [vmem:[#allocation8 + $0x10] sm:$0xff]
    %v210 = vld [vmem:[#allocation8 + $0x18] sm:$0xff]
    %v211 = vld [vmem:[#allocation8 + $0x20] sm:$0xff]
    %v212 = vld [vmem:[#allocation8 + $0x28] sm:$0xff]
    %v213 = vld [vmem:[#allocation8 + $0x30] sm:$0xff]
    %v214 = vld [vmem:[#allocation8 + $0x38] sm:$0xff]
    %v215 = vld [vmem:[#allocation8 + $0x40] sm:$0xff]
    %v216 = vld [vmem:[#allocation8 + $0x48] sm:$0xff]
    %v217 = vld [vmem:[#allocation8 + $0x50] sm:$0xff]
    %v218 = vld [vmem:[#allocation8 + $0x58] sm:$0xff]
    %v219 = vld [vmem:[#allocation8 + $0x60] sm:$0xff]
    %v220 = vld [vmem:[#allocation8 + $0x68] sm:$0xff]
    %v221 = vld [vmem:[#allocation8 + $0x70] sm:$0xff]
    %v222 = vld [vmem:[#allocation8 + $0x78] sm:$0xff]
    %v223 = vld [vmem:[#allocation8 + $0x80] sm:$0xff]
    %v224 = vld [vmem:[#allocation8 + $0x88] sm:$0xff]
    %v225 = vld [vmem:[#allocation8 + $0x90] sm:$0xff]
    %v226 = vld [vmem:[#allocation8 + $0x98] sm:$0xff]
    %v227 = vld [vmem:[#allocation8 + $0xa0] sm:$0xff]
    %v228 = vld [vmem:[#allocation8 + $0xa8] sm:$0xff]
    %v229 = vld [vmem:[#allocation8 + $0xb0] sm:$0xff]
    %v230 = vld [vmem:[#allocation8 + $0xb8] sm:$0xff]
    %v231 = vld [vmem:[#allocation8 + $0xc0] sm:$0xff]
    %v232 = vld [vmem:[#allocation8 + $0xc8] sm:$0xff]
    %v233 = vld [vmem:[#allocation8 + $0xd0] sm:$0xff]
    %v234 = vld [vmem:[#allocation8 + $0xd8] sm:$0xff]
    %v235 = vld [vmem:[#allocation8 + $0xe0] sm:$0xff]
    %v236 = vld [vmem:[#allocation8 + $0xe8] sm:$0xff]
    %v237 = vld [vmem:[#allocation8 + $0xf0] sm:$0xff]
    %v238 = vld [vmem:[#allocation8 + $0xf8] sm:$0xff]
    %v239 = vld [vmem:[#allocation8 + $0x100] sm:$0xff]
    %v240 = vld [vmem:[#allocation8 + $0x108] sm:$0xff]
    %v241 = vld [vmem:[#allocation8 + $0x110] sm:$0xff]
    %v242 = vld [vmem:[#allocation8 + $0x118] sm:$0xff]
    %v243 = vld [vmem:[#allocation8 + $0x120] sm:$0xff]
    %v244 = vld [vmem:[#allocation8 + $0x128] sm:$0xff]
    %v245 = vld [vmem:[#allocation8 + $0x130] sm:$0xff]
    %v246 = vld [vmem:[#allocation8 + $0x138] sm:$0xff]
    %v247 = vld [vmem:[#allocation8 + $0x140] sm:$0xff]
    %v248 = vld [vmem:[#allocation8 + $0x148] sm:$0xff]
    %v249 = vld [vmem:[#allocation8 + $0x150] sm:$0xff]
    %v250 = vld [vmem:[#allocation8 + $0x158] sm:$0xff]
    %v251 = vld [vmem:[#allocation8 + $0x160] sm:$0xff]
    %v252 = vld [vmem:[#allocation8 + $0x168] sm:$0xff]
    %v253 = vld [vmem:[#allocation8 + $0x170] sm:$0xff]
    %v254 = vld [vmem:[#allocation8 + $0x178] sm:$0xff]
    %255 = vmatpush.msra.mxu0 %v252
    %256 = vmatpush.msra.mxu0 %v249
    %257 = vmatpush.msra.mxu0 %v246
    %258 = vmatpush.msra.mxu0 %v243
    %259 = vmatpush.msra.mxu0 %v240
    %260 = vmatpush.msra.mxu0 %v237
    %261 = vmatpush.msra.mxu0 %v234
    %262 = vmatpush.msra.mxu0 %v231
    %263 = vmatpush.msra.mxu0 %v228
    %264 = vmatpush.msra.mxu0 %v225
    %265 = vmatpush.msra.mxu0 %v222
    %266 = vmatpush.msra.mxu0 %v219
    %267 = vmatpush.msra.mxu0 %v216
    %268 = vmatpush.msra.mxu0 %v213
    %269 = vmatpush.msra.mxu0 %v210
    %270 = vmatpush.msra.mxu0 %v207
    %271 = vmatmul.f32.gmra.mxu0 %v203
    %v272 = vpop.f32.mrf.mxu0
    %v273 = vadd.f32 0.0, %v272
    %274 = vmatmul.f32.gmra.mxu0 %v204
    %v275 = vpop.f32.mrf.mxu0
    %v276 = vadd.f32 0.0, %v275
    %277 = vmatmul.f32.gmra.mxu0 %v205
    %v278 = vpop.f32.mrf.mxu0
    %v279 = vadd.f32 0.0, %v278
    %280 = vmatmul.f32.gmra.mxu0 %v206
    %v281 = vpop.f32.mrf.mxu0
    %v282 = vadd.f32 0.0, %v281
    %283 = vdwg.mxu0
    %284 = vmatpush.msra.mxu0 %v253
    %285 = vmatpush.msra.mxu0 %v250
    %286 = vmatpush.msra.mxu0 %v247
    %287 = vmatpush.msra.mxu0 %v244
    %288 = vmatpush.msra.mxu0 %v241
    %289 = vmatpush.msra.mxu0 %v238
    %290 = vmatpush.msra.mxu0 %v235
    %291 = vmatpush.msra.mxu0 %v232
    %292 = vmatpush.msra.mxu0 %v229
    %293 = vmatpush.msra.mxu0 %v226
    %294 = vmatpush.msra.mxu0 %v223
    %295 = vmatpush.msra.mxu0 %v220
    %296 = vmatpush.msra.mxu0 %v217
    %297 = vmatpush.msra.mxu0 %v214
    %298 = vmatpush.msra.mxu0 %v211
    %299 = vmatpush.msra.mxu0 %v208
    %300 = vmatmul.f32.gmra.mxu0 %v203
    %v301 = vpop.f32.mrf.mxu0
    %v302 = vadd.f32 0.0, %v301
    %303 = vmatmul.f32.gmra.mxu0 %v204
    %v304 = vpop.f32.mrf.mxu0
    %v305 = vadd.f32 0.0, %v304
    %306 = vmatmul.f32.gmra.mxu0 %v205
    %v307 = vpop.f32.mrf.mxu0
    %v308 = vadd.f32 0.0, %v307
    %309 = vmatmul.f32.gmra.mxu0 %v206
    %v310 = vpop.f32.mrf.mxu0
    %v311 = vadd.f32 0.0, %v310
    %312 = vdwg.mxu0
    %313 = vmatpush.msra.mxu0 %v254
    %314 = vmatpush.msra.mxu0 %v251
    %315 = vmatpush.msra.mxu0 %v248
    %316 = vmatpush.msra.mxu0 %v245
    %317 = vmatpush.msra.mxu0 %v242
    %318 = vmatpush.msra.mxu0 %v239
    %319 = vmatpush.msra.mxu0 %v236
    %320 = vmatpush.msra.mxu0 %v233
    %321 = vmatpush.msra.mxu0 %v230
    %322 = vmatpush.msra.mxu0 %v227
    %323 = vmatpush.msra.mxu0 %v224
    %324 = vmatpush.msra.mxu0 %v221
    %325 = vmatpush.msra.mxu0 %v218
    %326 = vmatpush.msra.mxu0 %v215
    %327 = vmatpush.msra.mxu0 %v212
    %328 = vmatpush.msra.mxu0 %v209
    %329 = vmatmul.f32.gmra.mxu0 %v203
    %v330 = vpop.f32.mrf.mxu0
    %v331 = vadd.f32 0.0, %v330
    %332 = vmatmul.f32.gmra.mxu0 %v204
    %v333 = vpop.f32.mrf.mxu0
    %v334 = vadd.f32 0.0, %v333
    %335 = vmatmul.f32.gmra.mxu0 %v205
    %v336 = vpop.f32.mrf.mxu0
    %v337 = vadd.f32 0.0, %v336
    %338 = vmatmul.f32.gmra.mxu0 %v206
    %v339 = vpop.f32.mrf.mxu0
    %v340 = vadd.f32 0.0, %v339
    %341 = vdwg.mxu0
    %v342 = vlaneseq
    %v343 = vshrl.u32 %v342, 7
    %v344 = vadd.s32 %v343, 8
    %v345 = vadd.s32 %v343, 16
    %v346 = vadd.s32 %v343, 24
    %vm347 = vcmp.lt.s32.totalorder %v343, 0
    %v348 = vsub.s32 0, %v343
    %v349 = vsel %vm347, %v348, %v343
    %v350 = vshrl.u32 %v349, 4
    %v351 = vand.u32 %v349, 15
    %v352 = vsub.s32 0, %v351
    %v353 = vsel %vm347, %v352, %v351
    %vm354 = vcmp.lt.s32.totalorder %v344, 0
    %v355 = vsub.s32 0, %v344
    %v356 = vsel %vm354, %v355, %v344
    %v357 = vshrl.u32 %v356, 4
    %v358 = vand.u32 %v356, 15
    %v359 = vsub.s32 0, %v358
    %v360 = vsel %vm354, %v359, %v358
    %vm361 = vcmp.lt.s32.totalorder %v345, 0
    %v362 = vsub.s32 0, %v345
    %v363 = vsel %vm361, %v362, %v345
    %v364 = vshrl.u32 %v363, 4
    %v365 = vand.u32 %v363, 15
    %v366 = vsub.s32 0, %v365
    %v367 = vsel %vm361, %v366, %v365
    %vm368 = vcmp.lt.s32.totalorder %v346, 0
    %v369 = vsub.s32 0, %v346
    %v370 = vsel %vm368, %v369, %v346
    %v371 = vshrl.u32 %v370, 4
    %v372 = vand.u32 %v370, 15
    %v373 = vsub.s32 0, %v372
    %v374 = vsel %vm368, %v373, %v372
    %vm375 = vcmp.ne.s32.totalorder %v353, 0
    %vm376 = vcmp.ne.s32.totalorder %v360, 0
    %vm377 = vcmp.ne.s32.totalorder %v367, 0
    %vm378 = vcmp.ne.s32.totalorder %v374, 0
    %vm379 = vcmp.lt.s32.totalorder %v353, 0
    %vm380 = vcmp.lt.s32.totalorder %v360, 0
    %vm381 = vcmp.lt.s32.totalorder %v367, 0
    %vm382 = vcmp.lt.s32.totalorder %v374, 0
    %vm383 = vmand %vm379, %vm375
    %vm384 = vmand %vm380, %vm376
    %vm385 = vmand %vm381, %vm377
    %vm386 = vmand %vm382, %vm378
    %v387 = vadd.s32 %v353, 16
    %v388 = vadd.s32 %v360, 16
    %v389 = vadd.s32 %v367, 16
    %v390 = vadd.s32 %v374, 16
    %v391 = vsel %vm383, %v387, %v353
    %v392 = vsel %vm384, %v388, %v360
    %v393 = vsel %vm385, %v389, %v367
    %v394 = vsel %vm386, %v390, %v374
    %vm395 = vcmp.ge.s32.totalorder %v391, 2
    %vm396 = vcmp.ge.s32.totalorder %v392, 2
    %vm397 = vcmp.ge.s32.totalorder %v393, 2
    %vm398 = vcmp.ge.s32.totalorder %v394, 2
    %v399 = vrot.slane %v273, 6
    %v400 = vrot.slane %v276, 6
    %v401 = vrot.slane %v279, 6
    %v402 = vrot.slane %v282, 6
    %vm403 = vcmp.lt.s32.totalorder %v343, 2
    %v404 = vsel %vm403, %v401, %v402
    %v405 = vsel %vm403, %v400, %v401
    %v406 = vsel %vm403, %v399, %v400
    %v407 = vsel %vm403, %v402, %v399
    %v408 = vsel %vm395, %v407, 0.0
    %v409 = vsel %vm396, %v406, 0.0
    %v410 = vsel %vm397, %v405, 0.0
    %v411 = vsel %vm398, %v404, 0.0
    %vm412 = vcmp.lt.s32.totalorder %v391, 14
    %vm413 = vcmp.lt.s32.totalorder %v392, 14
    %vm414 = vcmp.lt.s32.totalorder %v393, 14
    %vm415 = vcmp.lt.s32.totalorder %v394, 14
    %v416 = vrot.slane %v331, 2
    %v417 = vrot.slane %v334, 2
    %v418 = vrot.slane %v337, 2
    %v419 = vrot.slane %v340, 2
    %vm420 = vcmp.lt.s32.totalorder %v343, 6
    %v421 = vsel %vm420, %v418, %v419
    %v422 = vsel %vm420, %v417, %v418
    %v423 = vsel %vm420, %v416, %v417
    %v424 = vsel %vm420, %v419, %v416
    %v425 = vsel %vm412, %v423, 0.0
    %v426 = vsel %vm413, %v422, 0.0
    %v427 = vsel %vm414, %v421, 0.0
    %v428 = vsel %vm415, %v424, 0.0
    %v429 = vadd.f32 %v408, %v302
    %v430 = vadd.f32 %v409, %v305
    %v431 = vadd.f32 %v410, %v308
    %v432 = vadd.f32 %v411, %v311
    %v433 = vadd.f32 %v429, %v425
    %v434 = vadd.f32 %v430, %v426
    %v435 = vadd.f32 %v431, %v427
    %v436 = vadd.f32 %v432, %v428
    %v437 = vld [vmem:[%s4] sm:$0x1]
    %v439 = vperm.slane %v437, 0
    %v441 = vadd.f32 %v433, %v439
    %v442 = vadd.f32 %v434, %v439
    %v443 = vadd.f32 %v435, %v439
    %v444 = vadd.f32 %v436, %v439
    %v445 = vmax.f32 %v441, 0.0
    %v446 = vmax.f32 %v442, 0.0
    %v447 = vmax.f32 %v443, 0.0
    %v448 = vmax.f32 %v444, 0.0
    %v449 = vld [vmem:[#allocation10] sm:$0xff]
    %v450 = vld [vmem:[#allocation10 + $0x8] sm:$0xff]
    %v451 = vld [vmem:[#allocation10 + $0x10] sm:$0xff]
    %v452 = vld [vmem:[#allocation10 + $0x18] sm:$0xff]
    %v453 = vld [vmem:[#allocation10 + $0x20] sm:$0xff]
    %v454 = vld [vmem:[#allocation10 + $0x28] sm:$0xff]
    %v455 = vld [vmem:[#allocation10 + $0x30] sm:$0xff]
    %v456 = vld [vmem:[#allocation10 + $0x38] sm:$0xff]
    %v457 = vld [vmem:[#allocation10 + $0x40] sm:$0xff]
    %v458 = vld [vmem:[#allocation10 + $0x48] sm:$0xff]
    %v459 = vld [vmem:[#allocation10 + $0x50] sm:$0xff]
    %v460 = vld [vmem:[#allocation10 + $0x58] sm:$0xff]
    %v461 = vld [vmem:[#allocation10 + $0x60] sm:$0xff]
    %v462 = vld [vmem:[#allocation10 + $0x68] sm:$0xff]
    %v463 = vld [vmem:[#allocation10 + $0x70] sm:$0xff]
    %v464 = vld [vmem:[#allocation10 + $0x78] sm:$0xff]
    %465 = vmatpush.msra.mxu0 %v464
    %466 = vmatpush.msra.mxu0 %v463
    %467 = vmatpush.msra.mxu0 %v462
    %468 = vmatpush.msra.mxu0 %v461
    %469 = vmatpush.msra.mxu0 %v460
    %470 = vmatpush.msra.mxu0 %v459
    %471 = vmatpush.msra.mxu0 %v458
    %472 = vmatpush.msra.mxu0 %v457
    %473 = vmatpush.msra.mxu0 %v456
    %474 = vmatpush.msra.mxu0 %v455
    %475 = vmatpush.msra.mxu0 %v454
    %476 = vmatpush.msra.mxu0 %v453
    %477 = vmatpush.msra.mxu0 %v452
    %478 = vmatpush.msra.mxu0 %v451
    %479 = vmatpush.msra.mxu0 %v450
    %480 = vmatpush.msra.mxu0 %v449
    %481 = vmatmul.f32.gmra.mxu0 %v445
    %v482 = vpop.f32.mrf.mxu0
    %v483 = vadd.f32 %v192, %v482
    %484 = vmatmul.f32.gmra.mxu0 %v446
    %v485 = vpop.f32.mrf.mxu0
    %v486 = vadd.f32 %v195, %v485
    %487 = vmatmul.f32.gmra.mxu0 %v447
    %v488 = vpop.f32.mrf.mxu0
    %v489 = vadd.f32 %v198, %v488
    %490 = vmatmul.f32.gmra.mxu0 %v448
    %v491 = vpop.f32.mrf.mxu0
    %v492 = vadd.f32 %v201, %v491
    %493 = vdwg.mxu0
    %v494 = vld [vmem:[%s6] sm:$0x1]
    %v496 = vperm.slane %v494, 0
    %v498 = vadd.f32 %v483, %v496
    %v499 = vadd.f32 %v486, %v496
    %v500 = vadd.f32 %v489, %v496
    %v501 = vadd.f32 %v492, %v496
    %v502 = vmax.f32 %v498, 0.0
    %v503 = vmax.f32 %v499, 0.0
    %v504 = vmax.f32 %v500, 0.0
    %v505 = vmax.f32 %v501, 0.0
    %506 = vst [vmem:[#allocation11] sm:$0xff] %v502
    %507 = vst [vmem:[#allocation11 + $0x8] sm:$0xff] %v503
    %508 = vst [vmem:[#allocation11 + $0x10] sm:$0xff] %v504
    %509 = vst [vmem:[#allocation11 + $0x18] sm:$0xff] %v505
    // Predicated region
    $region50: #{tpu_custom_call.1} parent=1 // pred_check
      _
    $region51: #{tpu_custom_call.1} parent=1 // pred_check_branch
      %511 = sbr.rel (0) target = $region53
    $region52: #{tpu_custom_call.1} parent=1 // pred_region
      %513 = vsyncadd [#allocation4], 0
      %s514 = sshll.u32 [#allocation11], 4
      %s515 = int_to_ptr.vmem [resolvable:$true] %s514
      %s516 = sshll.u32 %s7, 4
      %s517 = int_to_ptr.hbm [resolvable:$true] %s516
      %522 = dma.vmem_to_hbm [thread:$0]  %s515, 512, %s517, [#allocation4], 128, 128, 8
    $region53: #{tpu_custom_call.1} parent=1 // pred_fallthru
      _
    // Predicated region
    $region54: #{tpu_custom_call.1} parent=1 // pred_check
      _
    $region55: #{tpu_custom_call.1} parent=1 // pred_check_branch
      %524 = sbr.rel (0) target = $region57
    $region56: #{tpu_custom_call.1} parent=1 // pred_region
      %526 = dma.done [#allocation4], 512
    $region57: #{tpu_custom_call.1} parent=1 // pred_fallthru
      _
    %527 = vsyncpa [#allocation3], 1
    %528 = vsyncpa [#allocation6], 1
    %529 = vsyncpa [#allocation9], 1
    %530 = vsyncpa [#allocation4], 1

</llo_original>
